<compile_context>
chip_gen: v5e
topology: v5e:2x2
jax: 0.10.0
libtpu: 0.0.40
codegen_flags: <defaults>
</compile_context>

<pallas_src>
import functools

import jax
import jax.numpy as jnp
import numpy as np
from jax.experimental import pallas as pl
from jax.experimental.pallas import tpu as pltpu


def _round_up(v, m):
    return ((v + m - 1) // m) * m


# -----------------------------------------------------------------------------
# pltpu.roll direction probe (tiny one-off kernel).
# Guards the im2col shift signs against the rotate-direction convention of the
# installed jax/Mosaic version, so the conv taps are always placed correctly.
# -----------------------------------------------------------------------------
_ROLL_NUMPY = None


def _roll_matches_numpy():
    """True iff pltpu.roll follows np.roll semantics (y[i] = x[(i - s) % n])."""
    global _ROLL_NUMPY
    if _ROLL_NUMPY is None:
        def probe(x_ref, o_ref):
            o_ref[...] = pltpu.roll(x_ref[...], 1, 1)

        x = jnp.tile(jnp.arange(128, dtype=jnp.float32)[None, :], (8, 1))
        y = pl.pallas_call(
            probe, out_shape=jax.ShapeDtypeStruct((8, 128), jnp.float32))(x)
        _ROLL_NUMPY = bool(jax.device_get(y)[0, 0] == 127.0)
    return _ROLL_NUMPY


# -----------------------------------------------------------------------------
# Fused conv stack: block_depth x [Conv2d(3x3, 'same') + LeakyReLU(0.01)]
# Channels on sublanes, flattened (row-strided) pixels on lanes.
# -----------------------------------------------------------------------------
def _conv_stack_kernel(x_ref, w_ref, b_ref, vmask_ref, o_ref, cols_ref, *,
                       n_block, n_layers, cmax, shifts, neg_slope):
    """Fused conv stack on one batch block.

    x_ref    : (NB, Cmax, Pbuf) f32   pixel (h, w) lives at lane h*(W+2)+w;
                                      ghost columns / tail lanes are zero.
    w_ref    : (L, Cmax, 9*Cmax) bf16 transposed im2col weights (zero padded).
    b_ref    : (L, Cmax, 1) f32       biases (zero padded).
    vmask_ref: (1, Pbuf) f32          1.0 on real-pixel lanes, 0.0 elsewhere.
    o_ref    : (NB, Cmax, Pbuf) f32   last-layer activations, same layout.
    cols_ref : (9*Cmax, Pbuf) f32     scratch: im2col matrix for one layer.
    """
    vmask = vmask_ref[...]
    for nb in range(n_block):                        # static unroll, NB small
        cur = x_ref[nb]
        acc = cur
        for l in range(n_layers):                    # static unroll, L small
            # Build the 9 taps as lane rotations of the current activation
            # (XLU work) into the im2col scratch; row blocks are 8-aligned.
            for t, s in enumerate(shifts):
                piece = cur if s == 0 else pltpu.roll(cur, s, 1)
                cols_ref[t * cmax:(t + 1) * cmax, :] = piece
            cols = cols_ref[...].astype(jnp.bfloat16)
            # One lane-dense MXU matmul per layer: (Cmax, 9Cmax) @ (9Cmax, Pbuf)
            acc = jnp.dot(w_ref[l], cols, preferred_element_type=jnp.float32)
            acc = acc + b_ref[l]
            acc = jnp.where(acc > 0, acc, neg_slope * acc)   # LeakyReLU(0.01)
            if l < n_layers - 1:
                # Re-zero ghost columns / tail so the layout's implicit 'same'
                # padding stays valid for the next layer (replaces a memset).
                cur = acc * vmask
        o_ref[nb] = acc.astype(o_ref.dtype)


def conv_stack(x, w_stack, b_stack, *, roll_numpy, block_batch, neg_slope=0.01):
    """block_depth x [Conv2d(3x3,'same') + LeakyReLU] fused in one pallas_call.

    x       : (N, C, H, W) f32 (NCHW, as in the PyTorch module)
    w_stack : (L, Cmax, 9*Cmax) bf16  packed transposed im2col weights
    b_stack : (L, Cmax, 1) f32        packed biases
    returns : (N, C, H, W) f32
    """
    N, C, H, W = x.shape
    L, Cmax, K9 = w_stack.shape
    Wp = W + 2                      # row stride: 2 ghost (always-zero) columns
    Pfull = H * Wp                  # lanes actually holding image rows
    Pbuf = _round_up(Pfull + Wp + 1, 128)   # lane-dense buffer width

    NB = max(1, min(int(block_batch), N))
    Npad = _round_up(N, NB)

    # NCHW -> channels-on-sublanes / pixels-on-lanes (pure pad/reshape, no
    # transpose): pixel (h, w) at lane h*Wp + w; ghost columns and tail are 0.
    xp = jnp.pad(x, ((0, Npad - N), (0, Cmax - C), (0, 0), (0, Wp - W)))
    xp = xp.reshape(Npad, Cmax, Pfull)
    xp = jnp.pad(xp, ((0, 0), (0, 0), (0, Pbuf - Pfull)))

    # Lane-validity mask (1 on real pixels, 0 on ghost columns / tail).
    lanes = np.arange(Pbuf)
    vmask = jnp.asarray(
        ((lanes < Pfull) & ((lanes % Wp) < W)).astype(np.float32)[None, :])

    # Lane shift for tap (dh, dw): brings activation(h+dh-1, w+dw-1) onto lane
    # h*Wp + w.  Shift sign depends on the rotate convention (probed above).
    center = Wp + 1
    offs = [dh * Wp + dw for dh in range(3) for dw in range(3)]
    if roll_numpy:
        shifts = tuple((center - o) % Pbuf for o in offs)
    else:
        shifts = tuple((o - center) % Pbuf for o in offs)

    kernel = functools.partial(
        _conv_stack_kernel, n_block=NB, n_layers=L, cmax=Cmax,
        shifts=shifts, neg_slope=neg_slope)

    out = pl.pallas_call(
        kernel,
        out_shape=jax.ShapeDtypeStruct((Npad, Cmax, Pbuf), jnp.float32),
        grid=(Npad // NB,),
        in_specs=[
            pl.BlockSpec((NB, Cmax, Pbuf), lambda n: (n, 0, 0)),
            # TODO(synk): weight/bias blocks are grid-invariant; with large
            # filter counts mark them pl.Buffered(1) / hoist into scratch.
            pl.BlockSpec((L, Cmax, K9), lambda n: (0, 0, 0)),
            pl.BlockSpec((L, Cmax, 1), lambda n: (0, 0, 0)),
            pl.BlockSpec((1, Pbuf), lambda n: (0, 0)),
        ],
        out_specs=pl.BlockSpec((NB, Cmax, Pbuf), lambda n: (n, 0, 0)),
        scratch_shapes=[pltpu.VMEM((9 * Cmax, Pbuf), jnp.float32)],
        compiler_params=pltpu.CompilerParams(
            dimension_semantics=("parallel",),
            vmem_limit_bytes=32 * 1024 * 1024),
    )(xp, w_stack, b_stack, vmask)

    # Lane layout -> NCHW: static slices + reshape only (no transpose).
    y = out[:N, :C, :Pfull].reshape(N, C, H, Wp)[..., :W]
    return y


# -----------------------------------------------------------------------------
# Full CascadeBlock forward
# -----------------------------------------------------------------------------
@functools.partial(jax.jit, static_argnames=("roll_numpy", "block_batch"))
def _cascade_forward(w_stack, b_stack, x, og_kspace, mask, smap, *,
                     roll_numpy, block_batch):
    N, C, H, W = x.shape

    # --- conv stack (single fused Pallas kernel) ---
    y = conv_stack(x, w_stack, b_stack, roll_numpy=roll_numpy,
                   block_batch=block_batch)

    # --- data-consistency layer ---
    xc = y[:, ::2, :, :] + 1j * y[:, 1::2, :, :]          # to_complex
    # TODO(synk): 2-D FFT / fftshift have no clean Pallas equivalent; jnp.fft glue.
    fx = jnp.fft.fftshift(
        jnp.fft.fft2(jnp.fft.ifftshift(xc, axes=(-2, -1))), axes=(-2, -1))
    # Elementwise combine left to XLA so it fuses into the FFT epilogue
    # (per perf review; replaces the previous dc_combine pallas_call).
    mod_kspace = og_kspace + fx * (1.0 - mask)
    mod_x = jnp.fft.fftshift(
        jnp.fft.ifft2(jnp.fft.ifftshift(mod_kspace, axes=(-2, -1))),
        axes=(-2, -1))

    # to_re_img: complex image -> interleaved real/imag channels
    re = jnp.real(mod_x).astype(jnp.float32)
    im = jnp.imag(mod_x).astype(jnp.float32)
    out = jnp.stack([re, im], axis=2).reshape(N, C, H, W)

    # smap is threaded through unused, exactly like the PyTorch module.
    return out, og_kspace, mask, smap


def cascade_block_forward(packed_params, info_tuple, block_batch=None):
    w_stack, b_stack = packed_params
    x, og_kspace, mask, smap = info_tuple
    N, _, H, W = x.shape
    if block_batch is None:
        # Fold as many batch elements per grid step as fit ~512 KiB of block.
        Cmax = w_stack.shape[1]
        Wp = W + 2
        Pbuf = _round_up(H * Wp + Wp + 1, 128)
        block_batch = max(1, min(N, (512 * 1024) // (Cmax * Pbuf * 4)))
    return _cascade_forward(w_stack, b_stack, x, og_kspace, mask, smap,
                            roll_numpy=_roll_matches_numpy(),
                            block_batch=int(block_batch))


# -----------------------------------------------------------------------------
# Deterministic parameter construction + packing for the fused kernel
# -----------------------------------------------------------------------------
def make_params(input_channels, block_depth, filters, seed=42):
    """Per-layer (w, b) with w: (3,3,cin,cout), b: (cout,) — mirrors the module."""
    chans = [input_channels] + [filters] * (block_depth - 1) + [input_channels]
    params = []
    key = jax.random.PRNGKey(seed)
    for i in range(block_depth):
        key, wk, bk = jax.random.split(key, 3)
        cin, cout = chans[i], chans[i + 1]
        w = jax.random.normal(wk, (3, 3, cin, cout), jnp.float32) * 0.1
        b = jax.random.normal(bk, (cout,), jnp.float32) * 0.1
        params.append((w, b))
    return params


def pack_params(params):
    """Pack per-layer weights for the kernel.

    Returns:
      w_stack (L, Cmax, 9*Cmax) bf16 with
        w_stack[l, co, (dh*3+dw)*Cmax + ci] = w_l[dh, dw, ci, co]
      b_stack (L, Cmax, 1) f32
    """
    cmax = max(max(w.shape[2], w.shape[3]) for w, _ in params)
    cmax = max(8, _round_up(cmax, 8))
    ws, bs = [], []
    for w, b in params:
        cin, cout = w.shape[2], w.shape[3]
        wp = np.zeros((3, 3, cmax, cmax), np.float32)
        wp[:, :, :cin, :cout] = np.asarray(w)
        ws.append(wp.transpose(3, 0, 1, 2).reshape(cmax, 9 * cmax))
        bp = np.zeros((cmax, 1), np.float32)
        bp[:cout, 0] = np.asarray(b)
        bs.append(bp)
    return (jnp.asarray(np.stack(ws), jnp.bfloat16),
            jnp.asarray(np.stack(bs), jnp.float32))


# -----------------------------------------------------------------------------
# Pure-jnp reference (no Pallas) mirroring the PyTorch CascadeBlock
# -----------------------------------------------------------------------------
def _reference_forward(params, info_tuple, neg_slope=0.01):
    x, og_kspace, mask, smap = info_tuple
    N, C, H, W = x.shape
    h = x
    for w, b in params:                         # w: (3,3,cin,cout), b: (cout,)
        hp = jnp.pad(h, ((0, 0), (0, 0), (1, 1), (1, 1)))
        out = jnp.zeros((N, w.shape[3], H, W), jnp.float32)
        for dh in range(3):
            for dw in range(3):
                patch = hp[:, :, dh:dh + H, dw:dw + W]
                out = out + jnp.einsum('ncij,co->noij', patch, w[dh, dw])
        out = out + b.reshape(1, -1, 1, 1)
        h = jnp.where(out > 0, out, neg_slope * out)
    xc = h[:, ::2, :, :] + 1j * h[:, 1::2, :, :]
    fx = jnp.fft.fftshift(
        jnp.fft.fft2(jnp.fft.ifftshift(xc, axes=(-2, -1))), axes=(-2, -1))
    mod_kspace = og_kspace + fx * (1.0 - mask)
    mod_x = jnp.fft.fftshift(
        jnp.fft.ifft2(jnp.fft.ifftshift(mod_kspace, axes=(-2, -1))),
        axes=(-2, -1))
    re = jnp.real(mod_x).astype(jnp.float32)
    im = jnp.imag(mod_x).astype(jnp.float32)
    return (jnp.stack([re, im], axis=2).reshape(N, C, H, W),
            og_kspace, mask, smap)


if __name__ == "__main__":
    N, C, H, W = 2, 4, 16, 16          # batch=2, input_channels=4 (even), 16x16
    input_channels, block_depth, filters = C, 3, 8

    key = jax.random.PRNGKey(0)
    k1, k2, k3, k4 = jax.random.split(key, 4)
    x = jax.random.normal(k1, (N, C, H, W), jnp.float32)
    og_kspace = (jax.random.normal(k2, (N, C // 2, H, W), jnp.float32)
                 + 1j * jax.random.normal(k3, (N, C // 2, H, W), jnp.float32)
                 ).astype(jnp.complex64)
    mask = (jax.random.uniform(k4, (N, 1, H, W)) > 0.5).astype(jnp.float32)
    smap = jnp.ones((N, C // 2, H, W), jnp.complex64)

    params = make_params(input_channels, block_depth, filters)
    packed = pack_params(params)

    out = cascade_block_forward(packed, (x, og_kspace, mask, smap))
    jax.block_until_ready(out)

    # Tolerance check vs. pure-jnp reference (bf16 matmul inputs -> loose tol).
    ref = _reference_forward(params, (x, og_kspace, mask, smap))
    np.testing.assert_allclose(np.asarray(out[0]), np.asarray(ref[0]),
                               rtol=5e-2, atol=5e-2)
    assert out[0].shape == (N, C, H, W)
    print("KERNEL_OK")
</pallas_src>

<mosaic_0001>
module attributes {stable_mosaic.version = 11 : i64} {
  func.func @probe(%arg0: memref<8x128xf32, #tpu.memory_space<vmem>>, %arg1: memref<8x128xf32, #tpu.memory_space<vmem>>) attributes {dimension_semantics = [], scalar_prefetch = 0 : i64, scratch_operands = 0 : i64, tpu.core_type = #tpu.core_type<tc>} {
    %c0 = arith.constant 0 : index
    %c0_0 = arith.constant 0 : index
    %0 = vector.load %arg0[%c0, %c0_0] : memref<8x128xf32, #tpu.memory_space<vmem>>, vector<8x128xf32>
    %c1_i32 = arith.constant 1 : i32
    %1 = tpu.dynamic_rotate %0 by %c1_i32 dim 1 : vector<8x128xf32>, i32 -> vector<8x128xf32>
    %c0_1 = arith.constant 0 : index
    %c0_2 = arith.constant 0 : index
    %2 = vector.load %arg1[%c0_1, %c0_2] : memref<8x128xf32, #tpu.memory_space<vmem>>, vector<8x128xf32>
    tpu.vector_store %arg1[%c0_1, %c0_2], %1 {strides = array<i32>} : memref<8x128xf32, #tpu.memory_space<vmem>>, vector<8x128xf32>,
    return
  }
}

</mosaic_0001>

<llo_original>
// kernel: tpu_custom_call.1
$region0: #{tpu_custom_call.1}
  #allocation0 [shape = 'u32[]', space=smem, size = 0x4, offset = 0x4, fixed_abs, tag = 'smem constant byte address 0x4 - core index']
  #allocation1 [shape = 'u32[72,128]{1,0:T(1,128)}', space=vmem, size = 0x9000, scoped, tag = 'internal scratch']
  %s0 = inlined_call_operand.hbm [shape: f32[8,128], index: 0, kind: input, shape index: {}]
  %s1 = inlined_call_operand.hbm [shape: f32[8,128], index: 1, kind: output, shape index: {}]
  %s2 = sld [smem:[#allocation0]]
  $region18: #{tpu_custom_call.1} parent=0
    _
  %s4 = ssub.s32 1, %s2
  %s5 = scalar_select 0, %s4, %s2
  $region1: #{tpu_custom_call.1} parent=0
    #allocation2 [shape = 'u8[4096]{0}', space=vmem, size = 0x1000, scoped, tag = 'input window, operand 0, single buffered']
    #allocation3 [shape = 's32[1]{0}', space=sflag, size = 0x4, scoped, tag = 'scoped memory for tpu_custom_call.1']
    #allocation4 [shape = 's32[1]{0}', space=sflag, size = 0x4, scoped, tag = 'scoped memory for tpu_custom_call.1']
    #allocation5 [shape = 'u8[4096]{0}', space=vmem, size = 0x1000, scoped, tag = 'output window, operand 0, single buffered']
    %6 = vsyncpa [#allocation3], 0
    %7 = vsyncpa [#allocation4], 0
    // Predicated region
    $region2: #{tpu_custom_call.1} parent=1 // pred_check
      _
    $region3: #{tpu_custom_call.1} parent=1 // pred_check_branch
      %9 = sbr.rel (0) target = $region5
    $region4: #{tpu_custom_call.1} parent=1 // pred_region
      %11 = vsyncadd [#allocation3], 0
      %s13 = sshll.u32 %s0, 4
      %s14 = int_to_ptr.hbm [resolvable:$true] %s13
      %s15 = sshll.u32 [#allocation2], 4
      %s16 = int_to_ptr.vmem [resolvable:$true] %s15
      %18 = dma.hbm_to_vmem [thread:$0]  %s14, 128, %s16, [#allocation3]
    $region5: #{tpu_custom_call.1} parent=1 // pred_fallthru
      _
    // Predicated region
    $region6: #{tpu_custom_call.1} parent=1 // pred_check
      _
    $region7: #{tpu_custom_call.1} parent=1 // pred_check_branch
      %20 = sbr.rel (0) target = $region9
    $region8: #{tpu_custom_call.1} parent=1 // pred_region
      %22 = dma.done [#allocation3], 128
    $region9: #{tpu_custom_call.1} parent=1 // pred_fallthru
      _
    %v23 = vld [vmem:[#allocation2] sm:$0xff]
    %24 = vrot.lane.b32.xlu0 %v23, 1
    %v25 = vpop.permute.xlu0 %24
    %26 = vst [vmem:[#allocation5] sm:$0xff] %v25
    // Predicated region
    $region10: #{tpu_custom_call.1} parent=1 // pred_check
      _
    $region11: #{tpu_custom_call.1} parent=1 // pred_check_branch
      %28 = sbr.rel (0) target = $region13
    $region12: #{tpu_custom_call.1} parent=1 // pred_region
      %30 = vsyncadd [#allocation4], 0
      %s32 = sshll.u32 [#allocation5], 4
      %s33 = int_to_ptr.vmem [resolvable:$true] %s32
      %s34 = sshll.u32 %s1, 4
      %s35 = int_to_ptr.hbm [resolvable:$true] %s34
      %37 = dma.vmem_to_hbm [thread:$0]  %s33, 128, %s35, [#allocation4]
    $region13: #{tpu_custom_call.1} parent=1 // pred_fallthru
      _
    // Predicated region
    $region14: #{tpu_custom_call.1} parent=1 // pred_check
      _
    $region15: #{tpu_custom_call.1} parent=1 // pred_check_branch
      %39 = sbr.rel (0) target = $region17
    $region16: #{tpu_custom_call.1} parent=1 // pred_region
      %41 = dma.done [#allocation4], 128
    $region17: #{tpu_custom_call.1} parent=1 // pred_fallthru
      _
    %42 = vsyncpa [#allocation3], 1
    %43 = vsyncpa [#allocation4], 1

</llo_original>
